<compile_context>
chip_gen: v7x
topology: tpu7x:2x2x1
jax: 0.10.0
libtpu: 0.0.40
codegen_flags: <defaults>
</compile_context>

<pallas_src>
import jax
import jax.numpy as jnp
from jax.experimental import pallas as pl
from jax.experimental.pallas import tpu as pltpu


IN_FEATURES = 2
OUT_FEATURES = 1


def linear_kernel(params_ref, x_ref, o_ref):
    """y = x @ W^T + b for Linear(2, 1), computed on the VPU.

    params_ref : SMEM (3,) f32  -> [w00, w01, b0]
    x_ref      : VMEM (TILE_B, 2) f32
    o_ref      : VMEM (TILE_B, 1) f32
    """
    w0 = params_ref[0]
    w1 = params_ref[1]
    b0 = params_ref[2]
    x = x_ref[...]                                  # (TILE_B, 2)
    # Pure VPU formulation: a couple of VALU ops on one vreg, no MXU latency.
    y = x[:, 0:1] * w0 + x[:, 1:2] * w1 + b0        # (TILE_B, 1)
    o_ref[...] = y.astype(o_ref.dtype)


def linear_pallas(x, weight, bias, *, tile_b=None):
    B, in_f = x.shape
    out_f = weight.shape[0]
    assert in_f == IN_FEATURES and out_f == OUT_FEATURES

    # Flatten W (1,2) and b (1,) into a single SMEM-resident param vector:
    # one tiny copy instead of two double-buffered VMEM DMAs.
    params = jnp.concatenate(
        [weight.reshape(-1), bias.reshape(-1)]).astype(jnp.float32)

    if tile_b is None:
        # Large batch: 512-row tiles (>= ~85% of HBM roofline per measured
        # tiled-add data) while staying tiny vs. the 64 MiB v7x VMEM budget.
        # Small batch: one full block (also satisfies the (8,128) rule via
        # the full-array-dims exception).
        tile_b = 512 if (B > 512 and B % 512 == 0) else B

    grid = (pl.cdiv(B, tile_b),)

    return pl.pallas_call(
        linear_kernel,
        out_shape=jax.ShapeDtypeStruct((B, out_f), x.dtype),
        grid=grid,
        in_specs=[
            # Params live in SMEM; scalar reads in-kernel, no VMEM pipeline.
            pl.BlockSpec(memory_space=pltpu.MemorySpace.SMEM),
            # Only the batch dimension is tiled; features stay whole.
            pl.BlockSpec((tile_b, in_f), lambda i: (i, 0)),
        ],
        # TODO(synk): output last dim is 1 (masked 1-lane stores); a lane-dense
        # (1, B) output layout would require a wrapper-side transpose of x,
        # which costs more HBM traffic than the masked store saves for this op.
        out_specs=pl.BlockSpec((tile_b, out_f), lambda i: (i, 0)),
        compiler_params=pltpu.CompilerParams(
            dimension_semantics=("parallel",)),
    )(params, x)


class CustomModelPallas:
    """Pallas equivalent of CustomModel: a single nn.Linear(2, 1)."""

    def __init__(self, key):
        kw, kb = jax.random.split(key)
        # PyTorch default init: U(-1/sqrt(in), 1/sqrt(in)) for weight and bias.
        bound = 1.0 / jnp.sqrt(jnp.float32(IN_FEATURES))
        self.weight = jax.random.uniform(
            kw, (OUT_FEATURES, IN_FEATURES), jnp.float32, -bound, bound)
        self.bias = jax.random.uniform(
            kb, (OUT_FEATURES,), jnp.float32, -bound, bound)

    def __call__(self, x):
        return linear_pallas(x, self.weight, self.bias)


if __name__ == "__main__":
    key = jax.random.PRNGKey(0)
    k_param, k_x = jax.random.split(key)

    model = CustomModelPallas(k_param)

    # Small deterministic input: batch=8, in_features=2.
    x = jax.random.normal(k_x, (8, IN_FEATURES), jnp.float32)

    y = model(x)
    y = jax.block_until_ready(y)

    # Cross-check against plain-JAX reference (same math as nn.Linear).
    y_ref = x @ model.weight.T + model.bias
    assert y.shape == (8, OUT_FEATURES)
    assert jnp.allclose(y, y_ref, atol=1e-5), "mismatch vs reference"

    print("KERNEL_OK")
</pallas_src>

<mosaic_0001>
module attributes {stable_mosaic.version = 11 : i64} {
  func.func @linear_kernel(%arg0: i32, %arg1: memref<3xf32, #tpu.memory_space<smem>>, %arg2: memref<8x2xf32, #tpu.memory_space<vmem>>, %arg3: memref<8x1xf32, #tpu.memory_space<vmem>>) attributes {dimension_semantics = [#tpu.dimension_semantics<parallel>], iteration_bounds = array<i64: 1>, scalar_prefetch = 0 : i64, scratch_operands = 0 : i64, tpu.core_type = #tpu.core_type<tc>, window_params = [{transform_indices = @transform_0, window_bounds = array<i64: 3>}, {transform_indices = @transform_1, window_bounds = array<i64: 8, 2>}, {transform_indices = @transform_2, window_bounds = array<i64: 8, 1>}]} {
    %c0 = arith.constant 0 : index
    %0 = memref.load %arg1[%c0] : memref<3xf32, #tpu.memory_space<smem>>
    %c1 = arith.constant 1 : index
    %1 = memref.load %arg1[%c1] : memref<3xf32, #tpu.memory_space<smem>>
    %c2 = arith.constant 2 : index
    %2 = memref.load %arg1[%c2] : memref<3xf32, #tpu.memory_space<smem>>
    %c0_0 = arith.constant 0 : index
    %c0_1 = arith.constant 0 : index
    %3 = vector.load %arg2[%c0_0, %c0_1] : memref<8x2xf32, #tpu.memory_space<vmem>>, vector<8x2xf32>
    %4 = vector.extract_strided_slice %3 {offsets = [0, 0], sizes = [8, 1], strides = [1, 1]} : vector<8x2xf32> to vector<8x1xf32>
    %5 = vector.broadcast %0 : f32 to vector<8x1xf32>
    %6 = arith.mulf %4, %5 : vector<8x1xf32>
    %7 = vector.extract_strided_slice %3 {offsets = [0, 1], sizes = [8, 1], strides = [1, 1]} : vector<8x2xf32> to vector<8x1xf32>
    %8 = vector.broadcast %1 : f32 to vector<8x1xf32>
    %9 = arith.mulf %7, %8 : vector<8x1xf32>
    %10 = arith.addf %6, %9 : vector<8x1xf32>
    %11 = vector.broadcast %2 : f32 to vector<8x1xf32>
    %12 = arith.addf %10, %11 : vector<8x1xf32>
    %c0_2 = arith.constant 0 : index
    %c0_3 = arith.constant 0 : index
    %13 = vector.load %arg3[%c0_2, %c0_3] : memref<8x1xf32, #tpu.memory_space<vmem>>, vector<8x1xf32>
    tpu.vector_store %arg3[%c0_2, %c0_3], %12 {strides = array<i32>} : memref<8x1xf32, #tpu.memory_space<vmem>>, vector<8x1xf32>,
    return
  }
  func.func @transform_0(%arg0: i32) -> i32 {
    %c0_i32 = arith.constant 0 : i32
    %c0_i32_0 = arith.constant 0 : i32
    return %c0_i32 : i32
  }
  func.func @transform_1(%arg0: i32) -> (i32, i32) {
    %c0_i32 = arith.constant 0 : i32
    %c0_i32_0 = arith.constant 0 : i32
    return %arg0, %c0_i32 : i32, i32
  }
  func.func @transform_2(%arg0: i32) -> (i32, i32) {
    %c0_i32 = arith.constant 0 : i32
    %c0_i32_0 = arith.constant 0 : i32
    return %arg0, %c0_i32 : i32, i32
  }
}

</mosaic_0001>

<llo_original>
// kernel: tpu_custom_call.1
$region0: #{tpu_custom_call.1}
  #allocation0 [shape = 'u32[]', space=smem, size = 0x4, offset = 0x4, fixed_abs, tag = 'smem constant byte address 0x4 - core index']
  #allocation1 [shape = 'u32[144,128]{1,0:T(1,128)}', space=vmem, size = 0x12000, scoped, tag = 'internal scratch']
  %s0 = inlined_call_operand.vmem [shape: f32[3], index: 0, kind: input, shape index: {}]
  %s1 = inlined_call_operand.vmem [shape: f32[8,2], index: 1, kind: input, shape index: {}]
  %s2 = inlined_call_operand.vmem [shape: f32[8,1], index: 2, kind: output, shape index: {}]
  %s3 = sld [smem:[#allocation0]]
  $region22: #{tpu_custom_call.1} parent=0
    _
  %s5 = ssub.s32 1, %s3
  %s6 = scalar_select 0, %s5, %s3
  $region1: #{tpu_custom_call.1} parent=0
    #allocation2 [shape = 'u8[512]{0}', space=smem, size = 0x200, scoped, tag = 'input window, operand 0, single buffered']
    #allocation3 [shape = 's32[1]{0}', space=sflag, size = 0x4, scoped, tag = 'scoped memory for tpu_custom_call.1']
    %7 = vsyncpa [#allocation3], 0
    // Predicated region
    $region2: #{tpu_custom_call.1} parent=1 // pred_check
      _
    $region3: #{tpu_custom_call.1} parent=1 // pred_check_branch
      %9 = sbr.rel (0) target = $region5
    $region4: #{tpu_custom_call.1} parent=1 // pred_region
      %s11 = ssub.s32 16, 16
      %12 = vsyncadd [#allocation3], %s11
      %s14 = sshll.u32 %s0, 4
      %s15 = int_to_ptr.vmem [resolvable:$true] %s14
      %17 = dma.vmem_to_smem %s15, 16, [#allocation2], [#allocation3]
    $region5: #{tpu_custom_call.1} parent=1 // pred_fallthru
      _
    // Predicated region
    $region6: #{tpu_custom_call.1} parent=1 // pred_check
      _
    $region7: #{tpu_custom_call.1} parent=1 // pred_check_branch
      %19 = sbr.rel (0) target = $region9
    $region8: #{tpu_custom_call.1} parent=1 // pred_region
      _
    $region9: #{tpu_custom_call.1} parent=1 // pred_fallthru
      _
    // Predicated region
    $region10: #{tpu_custom_call.1} parent=1 // pred_check
      _
    $region11: #{tpu_custom_call.1} parent=1 // pred_check_branch
      %21 = sbr.rel (0) target = $region13
    $region12: #{tpu_custom_call.1} parent=1 // pred_region
      %22 = dma.done [#allocation3], 16
    $region13: #{tpu_custom_call.1} parent=1 // pred_fallthru
      _
    %23 = sfence
    %s24 = sld [smem:[#allocation2]]
    %s25 = sld [smem:[#allocation2 + $0x1]]
    %s26 = sld [smem:[#allocation2 + $0x2]]
    %v27 = vld [vmem:[%s1] sm:$0xff]
    %v28 = vstv %s24
    %v29 = vmul.f32 %v27, %v28
    %v30 = vstv %s25
    %v31 = vmul.f32 %v27, %v30
    %33 = vrot.lane.b32.xlu0 %v31, 127
    %v34 = vpop.permute.xlu0 %33
    %v36 = vadd.f32 %v29, %v34
    %v37 = vstv %s26
    %v38 = vadd.f32 %v36, %v37
    %vm39 = vcmask 7168
    %40 = vst.msk [vmem:[%s2] sm:$0xff] %vm39, %v38
    // Predicated region
    $region14: #{tpu_custom_call.1} parent=1 // pred_check
      _
    $region15: #{tpu_custom_call.1} parent=1 // pred_check_branch
      %42 = sbr.rel (0) target = $region17
    $region16: #{tpu_custom_call.1} parent=1 // pred_region
      _
    $region17: #{tpu_custom_call.1} parent=1 // pred_fallthru
      _
    // Predicated region
    $region18: #{tpu_custom_call.1} parent=1 // pred_check
      _
    $region19: #{tpu_custom_call.1} parent=1 // pred_check_branch
      %44 = sbr.rel (0) target = $region21
    $region20: #{tpu_custom_call.1} parent=1 // pred_region
      _
    $region21: #{tpu_custom_call.1} parent=1 // pred_fallthru
      _
    %45 = vsyncpa [#allocation3], 1

</llo_original>
